<compile_context>
chip_gen: v7x
topology: tpu7x:2x2x1
jax: 0.10.0
libtpu: 0.0.40
codegen_flags: <defaults>
</compile_context>

<pallas_src>
import jax
import jax.numpy as jnp
from jax.experimental import pallas as pl
from jax.experimental.pallas import tpu as pltpu


def _round_up(x: int, m: int) -> int:
    return ((x + m - 1) // m) * m


def _pick_tile(dim_128: int, max_tile: int) -> int:
    """Largest multiple of 128 that divides dim_128 and is <= max_tile."""
    q = dim_128 // 128
    cap = max(1, max_tile // 128)
    best = 1
    for d in range(1, q + 1):
        if q % d == 0 and d <= cap:
            best = d
    return best * 128


def _shrink_tile(dim_128: int, tile: int) -> int:
    """Largest multiple-of-128 divisor tile of dim_128 strictly < `tile`."""
    q = dim_128 // 128
    t = tile // 128
    best = None
    for d in range(1, q + 1):
        if q % d == 0 and d < t:
            best = d
    return best * 128 if best is not None else tile


def _linear_kernel_f32out(x_ref, w_ref, b_ref, o_ref):
    """Output-stationary: accumulate straight into the resident f32 out block."""
    k = pl.program_id(2)

    @pl.when(k == 0)
    def _init():
        o_ref[...] = jnp.zeros_like(o_ref)

    # Hot path: MXU matmul with f32 accumulation.
    o_ref[...] += jnp.dot(
        x_ref[...], w_ref[...], preferred_element_type=jnp.float32
    )

    @pl.when(k == pl.num_programs(2) - 1)
    def _finish():
        o_ref[...] += b_ref[...]          # (1, tn) broadcasts over (tm, tn)


def _linear_kernel_acc(x_ref, w_ref, b_ref, o_ref, acc_ref):
    """Scratch-accumulator variant, only used when the output is not f32."""
    k = pl.program_id(2)

    @pl.when(k == 0)
    def _init():
        acc_ref[...] = jnp.zeros_like(acc_ref)

    acc_ref[...] += jnp.dot(
        x_ref[...], w_ref[...], preferred_element_type=jnp.float32
    )

    @pl.when(k == pl.num_programs(2) - 1)
    def _finish():
        o_ref[...] = (acc_ref[...] + b_ref[...]).astype(o_ref.dtype)


def linear_forward(
    x,
    weight,
    bias,
    *,
    compute_dtype=jnp.bfloat16,   # None => strict f32 matmul path
    tm_max=1024,
    tn_max=512,
    tk_max=1024,
):
    """y = x @ weight + bias via a tiled Pallas TPU kernel.

    x:      (M, K) float32
    weight: (K, N) float32
    bias:   (N,)   float32
    returns (M, N) float32
    """
    M, K = x.shape
    K2, N = weight.shape
    assert K == K2, "input feature dim must match weight rows"
    out_dtype = x.dtype

    cdtype = jnp.dtype(compute_dtype) if compute_dtype is not None else jnp.dtype(x.dtype)
    cbytes = cdtype.itemsize
    obytes = jnp.dtype(out_dtype).itemsize

    # --- Generation-aware VMEM budget (v7x: 64 MiB/TC, v5e/v6e: 128 MiB). ---
    try:
        vmem_cap = int(pltpu.get_tpu_info().vmem_capacity_bytes)
    except Exception:
        vmem_cap = 64 * 1024 * 1024            # conservative (v7x) fallback
    vmem_limit = max(32 * 1024 * 1024,
                     min(vmem_cap - 16 * 1024 * 1024, 100 * 1024 * 1024))
    tile_budget = int(vmem_limit * 0.75)

    # --- Pad each dim only to a multiple of 128; tiles divide the padded dims.
    Mp, Kp, Np = _round_up(M, 128), _round_up(K, 128), _round_up(N, 128)

    if cbytes >= 4:
        # f32 operands don't hit the fast bf16 MXU path; keep tiles moderate.
        tm_max, tn_max, tk_max = min(tm_max, 512), min(tn_max, 512), min(tk_max, 512)

    tm = _pick_tile(Mp, tm_max)
    tn = _pick_tile(Np, tn_max)
    tk = _pick_tile(Kp, tk_max)

    # Keep >=2 parallel (i, j) blocks when possible so both TensorCores of a
    # v7x megacore get work.  Prefer splitting N: large tm preserves weight
    # reuse (weight HBM traffic scales with Mp/tm).
    if (Mp // tm) * (Np // tn) < 2:
        if Np // 128 >= 2:
            tn = _shrink_tile(Np, tn)
        elif Mp // 128 >= 2:
            tm = _shrink_tile(Mp, tm)

    use_scratch = out_dtype != jnp.float32

    def _footprint(tm_, tn_, tk_):
        buf = 2 * (tm_ * tk_ * cbytes + tk_ * tn_ * cbytes + tn_ * 4)
        buf += 2 * tm_ * tn_ * obytes
        if use_scratch:
            buf += tm_ * tn_ * 4
        return buf

    # Shrink tiles (largest dim first) until the double-buffered footprint
    # fits the per-generation budget.  Rarely triggers with the caps above.
    guard = 0
    while _footprint(tm, tn, tk) > tile_budget and guard < 16:
        guard += 1
        if tk >= tm and tk >= tn and tk > 128:
            tk = _shrink_tile(Kp, tk)
        elif tm >= tn and tm > 128:
            tm = _shrink_tile(Mp, tm)
        elif tn > 128:
            tn = _shrink_tile(Np, tn)
        else:
            break

    # --- Cast / pad operands (skipped when already aligned / already f32). ---
    x_p = x.astype(cdtype)
    w_p = weight.astype(cdtype)
    if Mp != M or Kp != K:
        x_p = jnp.pad(x_p, ((0, Mp - M), (0, Kp - K)))
    if Kp != K or Np != N:
        w_p = jnp.pad(w_p, ((0, Kp - K), (0, Np - N)))
    b_p = bias if Np == N else jnp.pad(bias, (0, Np - N))
    b2d = b_p.reshape(1, Np).astype(jnp.float32)

    grid = (Mp // tm, Np // tn, Kp // tk)
    n_i, n_j, _ = grid

    kernel = _linear_kernel_acc if use_scratch else _linear_kernel_f32out
    scratch = [pltpu.VMEM((tm, tn), jnp.float32)] if use_scratch else []

    cost = pl.CostEstimate(
        flops=2 * M * K * N,
        # Count re-streaming: x is read once per N-block, weight once per
        # M-block (post-cast itemsize), plus the output write and the bias.
        bytes_accessed=cbytes * (M * K * n_j + K * N * n_i)
        + obytes * M * N
        + 4 * N,
        transcendentals=0,
    )

    out = pl.pallas_call(
        kernel,
        out_shape=jax.ShapeDtypeStruct((Mp, Np), out_dtype),
        grid_spec=pltpu.PrefetchScalarGridSpec(
            num_scalar_prefetch=0,
            grid=grid,
            in_specs=[
                pl.BlockSpec((tm, tk), lambda i, j, k: (i, k)),
                # TODO(synk): if xprof still shows exposed DMA on v5e for long
                # K loops, add pipeline_mode=pl.Buffered(3) on this weight spec.
                pl.BlockSpec((tk, tn), lambda i, j, k: (k, j)),
                pl.BlockSpec((1, tn), lambda i, j, k: (0, j)),
            ],
            out_specs=pl.BlockSpec((tm, tn), lambda i, j, k: (i, j)),
            scratch_shapes=scratch,
        ),
        compiler_params=pltpu.CompilerParams(
            dimension_semantics=("parallel", "parallel", "arbitrary"),
            vmem_limit_bytes=vmem_limit,
        ),
        cost_estimate=cost,
    )(x_p, w_p, b2d)

    if Mp == M and Np == N:
        return out
    return out[:M, :N]


if __name__ == "__main__":
    key = jax.random.PRNGKey(0)

    # --- Case 1: shapes implied by the original script --------------------
    # x = distrib.rsample().T has shape (100, 2); Linear(i_size=2, o_size=4).
    # Use the strict f32 path to match the module's f32 semantics exactly.
    M, i_size, o_size = 100, 2, 4
    kx, kw, kb, k2 = jax.random.split(key, 4)

    x = jax.random.normal(kx, (M, i_size), dtype=jnp.float32)
    weight = jax.random.normal(kw, (i_size, o_size), dtype=jnp.float32) * 0.1
    bias = jax.random.normal(kb, (o_size,), dtype=jnp.float32) * 0.1

    y = jax.block_until_ready(linear_forward(x, weight, bias, compute_dtype=None))
    y_ref = x @ weight + bias
    assert y.shape == (M, o_size)
    assert jnp.allclose(y, y_ref, atol=1e-5, rtol=1e-5)

    # --- Case 2: multi-tile problem exercising the (i, j, k) grid, the
    #             megacore N-split, and the bf16-input / f32-accumulate path.
    M2, K2_, N2 = 384, 1024, 384
    kx2, kw2, kb2 = jax.random.split(k2, 3)
    x2 = jax.random.normal(kx2, (M2, K2_), dtype=jnp.float32)
    w2 = jax.random.normal(kw2, (K2_, N2), dtype=jnp.float32) * 0.05
    b2 = jax.random.normal(kb2, (N2,), dtype=jnp.float32) * 0.05

    y2 = jax.block_until_ready(linear_forward(x2, w2, b2))  # bf16 fast path
    y2_ref = x2 @ w2 + b2
    assert y2.shape == (M2, N2)
    rel_err = jnp.max(jnp.abs(y2 - y2_ref)) / (jnp.max(jnp.abs(y2_ref)) + 1e-6)
    assert rel_err < 2e-2, rel_err

    print("KERNEL_OK")
</pallas_src>

<mosaic_0001>
module attributes {stable_mosaic.version = 11 : i64} {
  func.func @_linear_kernel_f32out(%arg0: i32, %arg1: i32, %arg2: i32, %arg3: memref<128x128xf32, #tpu.memory_space<vmem>>, %arg4: memref<128x128xf32, #tpu.memory_space<vmem>>, %arg5: memref<1x128xf32, #tpu.memory_space<vmem>>, %arg6: memref<128x128xf32, #tpu.memory_space<vmem>>) attributes {dimension_semantics = [#tpu.dimension_semantics<parallel>, #tpu.dimension_semantics<parallel>, #tpu.dimension_semantics<arbitrary>], iteration_bounds = array<i64: 1, 1, 1>, scalar_prefetch = 0 : i64, scratch_operands = 0 : i64, tpu.core_type = #tpu.core_type<tc>, window_params = [{transform_indices = @transform_0, window_bounds = array<i64: 128, 128>}, {transform_indices = @transform_1, window_bounds = array<i64: 128, 128>}, {transform_indices = @transform_2, window_bounds = array<i64: 1, 128>}, {transform_indices = @transform_3, window_bounds = array<i64: 128, 128>}]} {
    %c0_i32 = arith.constant 0 : i32
    %0 = arith.cmpi eq, %arg2, %c0_i32 : i32
    %1 = arith.extui %0 : i1 to i32
    %c0_i32_0 = arith.constant 0 : i32
    %2 = arith.cmpi ne, %1, %c0_i32_0 : i32
    scf.if %2 {
      %cst_10 = arith.constant 0.000000e+00 : f32
      %12 = vector.broadcast %cst_10 : f32 to vector<128x128xf32>
      %c0_11 = arith.constant 0 : index
      %c0_12 = arith.constant 0 : index
      %13 = vector.load %arg6[%c0_11, %c0_12] : memref<128x128xf32, #tpu.memory_space<vmem>>, vector<128x128xf32>
      tpu.vector_store %arg6[%c0_11, %c0_12], %12 {strides = array<i32>} : memref<128x128xf32, #tpu.memory_space<vmem>>, vector<128x128xf32>,
    } else {
    }
    %c0 = arith.constant 0 : index
    %c0_1 = arith.constant 0 : index
    %3 = vector.load %arg6[%c0, %c0_1] : memref<128x128xf32, #tpu.memory_space<vmem>>, vector<128x128xf32>
    %c0_2 = arith.constant 0 : index
    %c0_3 = arith.constant 0 : index
    %4 = vector.load %arg3[%c0_2, %c0_3] : memref<128x128xf32, #tpu.memory_space<vmem>>, vector<128x128xf32>
    %c0_4 = arith.constant 0 : index
    %c0_5 = arith.constant 0 : index
    %5 = vector.load %arg4[%c0_4, %c0_5] : memref<128x128xf32, #tpu.memory_space<vmem>>, vector<128x128xf32>
    %cst = arith.constant dense<0.000000e+00> : vector<128x128xf32>
    %6 = tpu.matmul %4, %5, %cst {dimension_numbers = #tpu.dot_dimension_numbers<[1], [0], [0], [1], [0, 0, 1, 1], [], []>} : vector<128x128xf32>, vector<128x128xf32>, vector<128x128xf32> -> vector<128x128xf32>
    %7 = arith.addf %3, %6 : vector<128x128xf32>
    %c0_6 = arith.constant 0 : index
    %c0_7 = arith.constant 0 : index
    %8 = vector.load %arg6[%c0_6, %c0_7] : memref<128x128xf32, #tpu.memory_space<vmem>>, vector<128x128xf32>
    tpu.vector_store %arg6[%c0_6, %c0_7], %7 {strides = array<i32>} : memref<128x128xf32, #tpu.memory_space<vmem>>, vector<128x128xf32>,
    %c0_i32_8 = arith.constant 0 : i32
    %9 = arith.cmpi eq, %arg2, %c0_i32_8 : i32
    %10 = arith.extui %9 : i1 to i32
    %c0_i32_9 = arith.constant 0 : i32
    %11 = arith.cmpi ne, %10, %c0_i32_9 : i32
    scf.if %11 {
      %c0_10 = arith.constant 0 : index
      %c0_11 = arith.constant 0 : index
      %12 = vector.load %arg6[%c0_10, %c0_11] : memref<128x128xf32, #tpu.memory_space<vmem>>, vector<128x128xf32>
      %c0_12 = arith.constant 0 : index
      %c0_13 = arith.constant 0 : index
      %13 = vector.load %arg5[%c0_12, %c0_13] : memref<1x128xf32, #tpu.memory_space<vmem>>, vector<1x128xf32>
      %14 = vector.broadcast %13 : vector<1x128xf32> to vector<128x128xf32>
      %15 = arith.addf %12, %14 : vector<128x128xf32>
      %c0_14 = arith.constant 0 : index
      %c0_15 = arith.constant 0 : index
      %16 = vector.load %arg6[%c0_14, %c0_15] : memref<128x128xf32, #tpu.memory_space<vmem>>, vector<128x128xf32>
      tpu.vector_store %arg6[%c0_14, %c0_15], %15 {strides = array<i32>} : memref<128x128xf32, #tpu.memory_space<vmem>>, vector<128x128xf32>,
    } else {
    }
    return
  }
  func.func @transform_0(%arg0: i32, %arg1: i32, %arg2: i32) -> (i32, i32) {
    %c0_i32 = arith.constant 0 : i32
    return %arg0, %arg2 : i32, i32
  }
  func.func @transform_1(%arg0: i32, %arg1: i32, %arg2: i32) -> (i32, i32) {
    %c0_i32 = arith.constant 0 : i32
    return %arg2, %arg1 : i32, i32
  }
  func.func @transform_2(%arg0: i32, %arg1: i32, %arg2: i32) -> (i32, i32) {
    %c0_i32 = arith.constant 0 : i32
    %c0_i32_0 = arith.constant 0 : i32
    return %c0_i32, %arg1 : i32, i32
  }
  func.func @transform_3(%arg0: i32, %arg1: i32, %arg2: i32) -> (i32, i32) {
    %c0_i32 = arith.constant 0 : i32
    return %arg0, %arg1 : i32, i32
  }
}

</mosaic_0001>

<llo_original>
// kernel: tpu_custom_call.1
$region0: #{tpu_custom_call.1}
  #allocation0 [shape = 'u32[]', space=smem, size = 0x4, offset = 0x4, fixed_abs, tag = 'smem constant byte address 0x4 - core index']
  #allocation1 [shape = 'u32[144,128]{1,0:T(1,128)}', space=vmem, size = 0x12000, scoped, tag = 'internal scratch']
  %s0 = inlined_call_operand.hbm [shape: f32[128,128], index: 0, kind: input, shape index: {}]
  %s1 = inlined_call_operand.hbm [shape: f32[128,128], index: 1, kind: input, shape index: {}]
  %s2 = inlined_call_operand.vmem [shape: f32[1,128], index: 2, kind: input, shape index: {}]
  %s3 = inlined_call_operand.hbm [shape: f32[128,128], index: 3, kind: output, shape index: {}]
  %s4 = sld [smem:[#allocation0]]
  $region38: #{tpu_custom_call.1} parent=0
    _
  %s6 = ssub.s32 1, %s4
  %s7 = scalar_select 0, %s6, %s4
  $region1: #{tpu_custom_call.1} parent=0
    #allocation2 [shape = 'u8[65536]{0}', space=vmem, size = 0x10000, scoped, tag = 'input window, operand 0, single buffered']
    #allocation3 [shape = 's32[1]{0}', space=sflag, size = 0x4, scoped, tag = 'scoped memory for tpu_custom_call.1']
    #allocation4 [shape = 's32[1]{0}', space=sflag, size = 0x4, scoped, tag = 'scoped memory for tpu_custom_call.1']
    #allocation5 [shape = 'u8[65536]{0}', space=vmem, size = 0x10000, scoped, tag = 'input window, operand 1, single buffered']
    #allocation6 [shape = 's32[1]{0}', space=sflag, size = 0x4, scoped, tag = 'scoped memory for tpu_custom_call.1']
    #allocation7 [shape = 'u8[65536]{0}', space=vmem, size = 0x10000, scoped, tag = 'output window, operand 0, single buffered']
    %8 = vsyncpa [#allocation3], 0
    %9 = vsyncpa [#allocation6], 0
    %10 = vsyncpa [#allocation4], 0
    // Predicated region
    $region2: #{tpu_custom_call.1} parent=1 // pred_check
      _
    $region3: #{tpu_custom_call.1} parent=1 // pred_check_branch
      %12 = sbr.rel (0) target = $region5
    $region4: #{tpu_custom_call.1} parent=1 // pred_region
      %s14 = ssub.s32 2048, 2048
      %15 = vsyncadd [#allocation3], %s14
      %s16 = sshll.u32 [#allocation2], 4
      %s17 = int_to_ptr.vmem [resolvable:$true] %s16
      %22 = dma.hbm_to_vmem [thread:$0]  %s0, 2048, %s17, [#allocation3], 128, 128, 8
    $region5: #{tpu_custom_call.1} parent=1 // pred_fallthru
      _
    // Predicated region
    $region6: #{tpu_custom_call.1} parent=1 // pred_check
      _
    $region7: #{tpu_custom_call.1} parent=1 // pred_check_branch
      %24 = sbr.rel (0) target = $region9
    $region8: #{tpu_custom_call.1} parent=1 // pred_region
      %s26 = ssub.s32 2048, 2048
      %27 = vsyncadd [#allocation6], %s26
      %s28 = sshll.u32 [#allocation5], 4
      %s29 = int_to_ptr.vmem [resolvable:$true] %s28
      %34 = dma.hbm_to_vmem [thread:$0]  %s1, 2048, %s29, [#allocation6], 128, 128, 8
    $region9: #{tpu_custom_call.1} parent=1 // pred_fallthru
      _
    // Predicated region
    $region10: #{tpu_custom_call.1} parent=1 // pred_check
      _
    $region11: #{tpu_custom_call.1} parent=1 // pred_check_branch
      %36 = sbr.rel (0) target = $region13
    $region12: #{tpu_custom_call.1} parent=1 // pred_region
      _
    $region13: #{tpu_custom_call.1} parent=1 // pred_fallthru
      _
    // Predicated region
    $region14: #{tpu_custom_call.1} parent=1 // pred_check
      _
    $region15: #{tpu_custom_call.1} parent=1 // pred_check_branch
      %38 = sbr.rel (0) target = $region17
    $region16: #{tpu_custom_call.1} parent=1 // pred_region
      %39 = dma.done [#allocation3], 2048
    $region17: #{tpu_custom_call.1} parent=1 // pred_fallthru
      _
    // Predicated region
    $region18: #{tpu_custom_call.1} parent=1 // pred_check
      _
    $region19: #{tpu_custom_call.1} parent=1 // pred_check_branch
      %41 = sbr.rel (0) target = $region21
    $region20: #{tpu_custom_call.1} parent=1 // pred_region
      %42 = dma.done [#allocation6], 2048
    $region21: #{tpu_custom_call.1} parent=1 // pred_fallthru
      _
    %p43 = scmp.eq.s32.totalorder 0, 0
    // Predicated region
    $region22: #{tpu_custom_call.1} parent=1 // pred_check
      %p44 = pneg %p43
    $region23: #{tpu_custom_call.1} parent=1 // pred_check_branch
      %46 = sbr.rel (%p44) target = $region25
    $region24: #{tpu_custom_call.1} parent=1 // pred_region
      %47 = vst [vmem:[#allocation7] sm:$0xff] 0.0
      %48 = vst [vmem:[#allocation7 + $0x8] sm:$0xff] 0.0
      %49 = vst [vmem:[#allocation7 + $0x10] sm:$0xff] 0.0
      %50 = vst [vmem:[#allocation7 + $0x18] sm:$0xff] 0.0
      %51 = vst [vmem:[#allocation7 + $0x20] sm:$0xff] 0.0
      %52 = vst [vmem:[#allocation7 + $0x28] sm:$0xff] 0.0
      %53 = vst [vmem:[#allocation7 + $0x30] sm:$0xff] 0.0
      %54 = vst [vmem:[#allocation7 + $0x38] sm:$0xff] 0.0
      %55 = vst [vmem:[#allocation7 + $0x40] sm:$0xff] 0.0
      %56 = vst [vmem:[#allocation7 + $0x48] sm:$0xff] 0.0
      %57 = vst [vmem:[#allocation7 + $0x50] sm:$0xff] 0.0
      %58 = vst [vmem:[#allocation7 + $0x58] sm:$0xff] 0.0
      %59 = vst [vmem:[#allocation7 + $0x60] sm:$0xff] 0.0
      %60 = vst [vmem:[#allocation7 + $0x68] sm:$0xff] 0.0
      %61 = vst [vmem:[#allocation7 + $0x70] sm:$0xff] 0.0
      %62 = vst [vmem:[#allocation7 + $0x78] sm:$0xff] 0.0
    $region25: #{tpu_custom_call.1} parent=1 // pred_fallthru
      _
    %v63 = vld [vmem:[#allocation7] sm:$0xff]
    %v64 = vld [vmem:[#allocation7 + $0x8] sm:$0xff]
    %v65 = vld [vmem:[#allocation7 + $0x10] sm:$0xff]
    %v66 = vld [vmem:[#allocation7 + $0x18] sm:$0xff]
    %v67 = vld [vmem:[#allocation7 + $0x20] sm:$0xff]
    %v68 = vld [vmem:[#allocation7 + $0x28] sm:$0xff]
    %v69 = vld [vmem:[#allocation7 + $0x30] sm:$0xff]
    %v70 = vld [vmem:[#allocation7 + $0x38] sm:$0xff]
    %v71 = vld [vmem:[#allocation7 + $0x40] sm:$0xff]
    %v72 = vld [vmem:[#allocation7 + $0x48] sm:$0xff]
    %v73 = vld [vmem:[#allocation7 + $0x50] sm:$0xff]
    %v74 = vld [vmem:[#allocation7 + $0x58] sm:$0xff]
    %v75 = vld [vmem:[#allocation7 + $0x60] sm:$0xff]
    %v76 = vld [vmem:[#allocation7 + $0x68] sm:$0xff]
    %v77 = vld [vmem:[#allocation7 + $0x70] sm:$0xff]
    %v78 = vld [vmem:[#allocation7 + $0x78] sm:$0xff]
    %v79 = vld [vmem:[#allocation2] sm:$0xff]
    %v80 = vld [vmem:[#allocation2 + $0x8] sm:$0xff]
    %v81 = vld [vmem:[#allocation2 + $0x10] sm:$0xff]
    %v82 = vld [vmem:[#allocation2 + $0x18] sm:$0xff]
    %v83 = vld [vmem:[#allocation2 + $0x20] sm:$0xff]
    %v84 = vld [vmem:[#allocation2 + $0x28] sm:$0xff]
    %v85 = vld [vmem:[#allocation2 + $0x30] sm:$0xff]
    %v86 = vld [vmem:[#allocation2 + $0x38] sm:$0xff]
    %v87 = vld [vmem:[#allocation2 + $0x40] sm:$0xff]
    %v88 = vld [vmem:[#allocation2 + $0x48] sm:$0xff]
    %v89 = vld [vmem:[#allocation2 + $0x50] sm:$0xff]
    %v90 = vld [vmem:[#allocation2 + $0x58] sm:$0xff]
    %v91 = vld [vmem:[#allocation2 + $0x60] sm:$0xff]
    %v92 = vld [vmem:[#allocation2 + $0x68] sm:$0xff]
    %v93 = vld [vmem:[#allocation2 + $0x70] sm:$0xff]
    %v94 = vld [vmem:[#allocation2 + $0x78] sm:$0xff]
    %v95 = vld [vmem:[#allocation5] sm:$0xff]
    %v96 = vld [vmem:[#allocation5 + $0x8] sm:$0xff]
    %v97 = vld [vmem:[#allocation5 + $0x10] sm:$0xff]
    %v98 = vld [vmem:[#allocation5 + $0x18] sm:$0xff]
    %v99 = vld [vmem:[#allocation5 + $0x20] sm:$0xff]
    %v100 = vld [vmem:[#allocation5 + $0x28] sm:$0xff]
    %v101 = vld [vmem:[#allocation5 + $0x30] sm:$0xff]
    %v102 = vld [vmem:[#allocation5 + $0x38] sm:$0xff]
    %v103 = vld [vmem:[#allocation5 + $0x40] sm:$0xff]
    %v104 = vld [vmem:[#allocation5 + $0x48] sm:$0xff]
    %v105 = vld [vmem:[#allocation5 + $0x50] sm:$0xff]
    %v106 = vld [vmem:[#allocation5 + $0x58] sm:$0xff]
    %v107 = vld [vmem:[#allocation5 + $0x60] sm:$0xff]
    %v108 = vld [vmem:[#allocation5 + $0x68] sm:$0xff]
    %v109 = vld [vmem:[#allocation5 + $0x70] sm:$0xff]
    %v110 = vld [vmem:[#allocation5 + $0x78] sm:$0xff]
    %111 = vmatprep.subr.mxu0 0.0
    %112 = vmatpush1.msra.mxu0 %v95
    %113 = vmatprep.subr.mxu0 0.0
    %114 = vmatpush1.msra.mxu0 %v96
    %115 = vmatprep.subr.mxu0 0.0
    %116 = vmatpush1.msra.mxu0 %v97
    %117 = vmatprep.subr.mxu0 0.0
    %118 = vmatpush1.msra.mxu0 %v98
    %119 = vmatprep.subr.mxu0 0.0
    %120 = vmatpush1.msra.mxu0 %v99
    %121 = vmatprep.subr.mxu0 0.0
    %122 = vmatpush1.msra.mxu0 %v100
    %123 = vmatprep.subr.mxu0 0.0
    %124 = vmatpush1.msra.mxu0 %v101
    %125 = vmatprep.subr.mxu0 0.0
    %126 = vmatpush1.msra.mxu0 %v102
    %127 = vmatprep.subr.mxu0 0.0
    %128 = vmatpush1.msra.mxu0 %v103
    %129 = vmatprep.subr.mxu0 0.0
    %130 = vmatpush1.msra.mxu0 %v104
    %131 = vmatprep.subr.mxu0 0.0
    %132 = vmatpush1.msra.mxu0 %v105
    %133 = vmatprep.subr.mxu0 0.0
    %134 = vmatpush1.msra.mxu0 %v106
    %135 = vmatprep.subr.mxu0 0.0
    %136 = vmatpush1.msra.mxu0 %v107
    %137 = vmatprep.subr.mxu0 0.0
    %138 = vmatpush1.msra.mxu0 %v108
    %139 = vmatprep.subr.mxu0 0.0
    %140 = vmatpush1.msra.mxu0 %v109
    %141 = vmatprep.subr.mxu0 0.0
    %142 = vmatpush1.msra.mxu0 %v110
    %143 = vmatprep.subr.mxu0 0.0
    %144 = vmatpush1.msra.mxu0 0.0
    %145 = vmatprep.subr.mxu0 0.0
    %146 = vmatpush1.msra.mxu0 0.0
    %147 = vmatprep.subr.mxu0 0.0
    %148 = vmatpush1.msra.mxu0 0.0
    %149 = vmatprep.subr.mxu0 0.0
    %150 = vmatpush1.msra.mxu0 0.0
    %151 = vmatprep.subr.mxu0 0.0
    %152 = vmatpush1.msra.mxu0 0.0
    %153 = vmatprep.subr.mxu0 0.0
    %154 = vmatpush1.msra.mxu0 0.0
    %155 = vmatprep.subr.mxu0 0.0
    %156 = vmatpush1.msra.mxu0 0.0
    %157 = vmatprep.subr.mxu0 0.0
    %158 = vmatpush1.msra.mxu0 0.0
    %159 = vmatprep.subr.mxu0 0.0
    %160 = vmatpush1.msra.mxu0 0.0
    %161 = vmatprep.subr.mxu0 0.0
    %162 = vmatpush1.msra.mxu0 0.0
    %163 = vmatprep.subr.mxu0 0.0
    %164 = vmatpush1.msra.mxu0 0.0
    %165 = vmatprep.subr.mxu0 0.0
    %166 = vmatpush1.msra.mxu0 0.0
    %167 = vmatprep.subr.mxu0 0.0
    %168 = vmatpush1.msra.mxu0 0.0
    %169 = vmatprep.subr.mxu0 0.0
    %170 = vmatpush1.msra.mxu0 0.0
    %171 = vmatprep.subr.mxu0 0.0
    %172 = vmatpush1.msra.mxu0 0.0
    %173 = vmatprep.subr.mxu0 0.0
    %174 = vmatpush1.msra.mxu0 0.0
    %175 = vmatprep.mubr.f32.mxu0 0.0
    %176 = vmatmul.mubr.f32.gmra.mrb[0].mxu0 %v79
    %v177 = vpop.f32.mrb[0].mxu0
    %v178 = vadd.f32 0.0, %v177
    %v179 = vpop.f32.mrb[0].mxu0
    %180 = vmatprep.mubr.f32.mxu0 0.0
    %181 = vmatmul.mubr.f32.gmra.mrb[0].mxu0 %v80
    %v182 = vpop.f32.mrb[0].mxu0
    %v183 = vadd.f32 0.0, %v182
    %v184 = vpop.f32.mrb[0].mxu0
    %185 = vmatprep.mubr.f32.mxu0 0.0
    %186 = vmatmul.mubr.f32.gmra.mrb[0].mxu0 %v81
    %v187 = vpop.f32.mrb[0].mxu0
    %v188 = vadd.f32 0.0, %v187
    %v189 = vpop.f32.mrb[0].mxu0
    %190 = vmatprep.mubr.f32.mxu0 0.0
    %191 = vmatmul.mubr.f32.gmra.mrb[0].mxu0 %v82
    %v192 = vpop.f32.mrb[0].mxu0
    %v193 = vadd.f32 0.0, %v192
    %v194 = vpop.f32.mrb[0].mxu0
    %195 = vmatprep.mubr.f32.mxu0 0.0
    %196 = vmatmul.mubr.f32.gmra.mrb[0].mxu0 %v83
    %v197 = vpop.f32.mrb[0].mxu0
    %v198 = vadd.f32 0.0, %v197
    %v199 = vpop.f32.mrb[0].mxu0
    %200 = vmatprep.mubr.f32.mxu0 0.0
    %201 = vmatmul.mubr.f32.gmra.mrb[0].mxu0 %v84
    %v202 = vpop.f32.mrb[0].mxu0
    %v203 = vadd.f32 0.0, %v202
    %v204 = vpop.f32.mrb[0].mxu0
    %205 = vmatprep.mubr.f32.mxu0 0.0
    %206 = vmatmul.mubr.f32.gmra.mrb[0].mxu0 %v85
    %v207 = vpop.f32.mrb[0].mxu0
    %v208 = vadd.f32 0.0, %v207
    %v209 = vpop.f32.mrb[0].mxu0
    %210 = vmatprep.mubr.f32.mxu0 0.0
    %211 = vmatmul.mubr.f32.gmra.mrb[0].mxu0 %v86
    %v212 = vpop.f32.mrb[0].mxu0
    %v213 = vadd.f32 0.0, %v212
    %v214 = vpop.f32.mrb[0].mxu0
    %215 = vmatprep.mubr.f32.mxu0 0.0
    %216 = vmatmul.mubr.f32.gmra.mrb[0].mxu0 %v87
    %v217 = vpop.f32.mrb[0].mxu0
    %v218 = vadd.f32 0.0, %v217
    %v219 = vpop.f32.mrb[0].mxu0
    %220 = vmatprep.mubr.f32.mxu0 0.0
    %221 = vmatmul.mubr.f32.gmra.mrb[0].mxu0 %v88
    %v222 = vpop.f32.mrb[0].mxu0
    %v223 = vadd.f32 0.0, %v222
    %v224 = vpop.f32.mrb[0].mxu0
    %225 = vmatprep.mubr.f32.mxu0 0.0
    %226 = vmatmul.mubr.f32.gmra.mrb[0].mxu0 %v89
    %v227 = vpop.f32.mrb[0].mxu0
    %v228 = vadd.f32 0.0, %v227
    %v229 = vpop.f32.mrb[0].mxu0
    %230 = vmatprep.mubr.f32.mxu0 0.0
    %231 = vmatmul.mubr.f32.gmra.mrb[0].mxu0 %v90
    %v232 = vpop.f32.mrb[0].mxu0
    %v233 = vadd.f32 0.0, %v232
    %v234 = vpop.f32.mrb[0].mxu0
    %235 = vmatprep.mubr.f32.mxu0 0.0
    %236 = vmatmul.mubr.f32.gmra.mrb[0].mxu0 %v91
    %v237 = vpop.f32.mrb[0].mxu0
    %v238 = vadd.f32 0.0, %v237
    %v239 = vpop.f32.mrb[0].mxu0
    %240 = vmatprep.mubr.f32.mxu0 0.0
    %241 = vmatmul.mubr.f32.gmra.mrb[0].mxu0 %v92
    %v242 = vpop.f32.mrb[0].mxu0
    %v243 = vadd.f32 0.0, %v242
    %v244 = vpop.f32.mrb[0].mxu0
    %245 = vmatprep.mubr.f32.mxu0 0.0
    %246 = vmatmul.mubr.f32.gmra.mrb[0].mxu0 %v93
    %v247 = vpop.f32.mrb[0].mxu0
    %v248 = vadd.f32 0.0, %v247
    %v249 = vpop.f32.mrb[0].mxu0
    %250 = vmatprep.mubr.f32.mxu0 0.0
    %251 = vmatmul.mubr.f32.gmra.mrb[0].mxu0 %v94
    %v252 = vpop.f32.mrb[0].mxu0
    %v253 = vadd.f32 0.0, %v252
    %v254 = vpop.f32.mrb[0].mxu0
    %255 = vdwg.mxu0
    %v256 = vadd.f32 %v63, %v178
    %v257 = vadd.f32 %v64, %v183
    %v258 = vadd.f32 %v65, %v188
    %v259 = vadd.f32 %v66, %v193
    %v260 = vadd.f32 %v67, %v198
    %v261 = vadd.f32 %v68, %v203
    %v262 = vadd.f32 %v69, %v208
    %v263 = vadd.f32 %v70, %v213
    %v264 = vadd.f32 %v71, %v218
    %v265 = vadd.f32 %v72, %v223
    %v266 = vadd.f32 %v73, %v228
    %v267 = vadd.f32 %v74, %v233
    %v268 = vadd.f32 %v75, %v238
    %v269 = vadd.f32 %v76, %v243
    %v270 = vadd.f32 %v77, %v248
    %v271 = vadd.f32 %v78, %v253
    %272 = vst [vmem:[#allocation7] sm:$0xff] %v256
    %273 = vst [vmem:[#allocation7 + $0x8] sm:$0xff] %v257
    %274 = vst [vmem:[#allocation7 + $0x10] sm:$0xff] %v258
    %275 = vst [vmem:[#allocation7 + $0x18] sm:$0xff] %v259
    %276 = vst [vmem:[#allocation7 + $0x20] sm:$0xff] %v260
    %277 = vst [vmem:[#allocation7 + $0x28] sm:$0xff] %v261
    %278 = vst [vmem:[#allocation7 + $0x30] sm:$0xff] %v262
    %279 = vst [vmem:[#allocation7 + $0x38] sm:$0xff] %v263
    %280 = vst [vmem:[#allocation7 + $0x40] sm:$0xff] %v264
    %281 = vst [vmem:[#allocation7 + $0x48] sm:$0xff] %v265
    %282 = vst [vmem:[#allocation7 + $0x50] sm:$0xff] %v266
    %283 = vst [vmem:[#allocation7 + $0x58] sm:$0xff] %v267
    %284 = vst [vmem:[#allocation7 + $0x60] sm:$0xff] %v268
    %285 = vst [vmem:[#allocation7 + $0x68] sm:$0xff] %v269
    %286 = vst [vmem:[#allocation7 + $0x70] sm:$0xff] %v270
    %287 = vst [vmem:[#allocation7 + $0x78] sm:$0xff] %v271
    // Predicated region
    $region26: #{tpu_custom_call.1} parent=1 // pred_check
      %p288 = pneg %p43
    $region27: #{tpu_custom_call.1} parent=1 // pred_check_branch
      %290 = sbr.rel (%p288) target = $region29
    $region28: #{tpu_custom_call.1} parent=1 // pred_region
      %v291 = vld [vmem:[#allocation7] sm:$0xff]
      %v292 = vld [vmem:[#allocation7 + $0x8] sm:$0xff]
      %v293 = vld [vmem:[#allocation7 + $0x10] sm:$0xff]
      %v294 = vld [vmem:[#allocation7 + $0x18] sm:$0xff]
      %v295 = vld [vmem:[#allocation7 + $0x20] sm:$0xff]
      %v296 = vld [vmem:[#allocation7 + $0x28] sm:$0xff]
      %v297 = vld [vmem:[#allocation7 + $0x30] sm:$0xff]
      %v298 = vld [vmem:[#allocation7 + $0x38] sm:$0xff]
      %v299 = vld [vmem:[#allocation7 + $0x40] sm:$0xff]
      %v300 = vld [vmem:[#allocation7 + $0x48] sm:$0xff]
      %v301 = vld [vmem:[#allocation7 + $0x50] sm:$0xff]
      %v302 = vld [vmem:[#allocation7 + $0x58] sm:$0xff]
      %v303 = vld [vmem:[#allocation7 + $0x60] sm:$0xff]
      %v304 = vld [vmem:[#allocation7 + $0x68] sm:$0xff]
      %v305 = vld [vmem:[#allocation7 + $0x70] sm:$0xff]
      %v306 = vld [vmem:[#allocation7 + $0x78] sm:$0xff]
      %v307 = vld [vmem:[%s2] sm:$0x1]
      %v309 = vlaneseq
      %v310 = vshrl.u32 %v309, 7
      %v311 = vsub.s32 0, %v310
      %v312 = vrot.slane %v307, %v311
      %v314 = vadd.f32 %v291, %v312
      %v315 = vadd.f32 %v292, %v312
      %v316 = vadd.f32 %v293, %v312
      %v317 = vadd.f32 %v294, %v312
      %v318 = vadd.f32 %v295, %v312
      %v319 = vadd.f32 %v296, %v312
      %v320 = vadd.f32 %v297, %v312
      %v321 = vadd.f32 %v298, %v312
      %v322 = vadd.f32 %v299, %v312
      %v323 = vadd.f32 %v300, %v312
      %v324 = vadd.f32 %v301, %v312
      %v325 = vadd.f32 %v302, %v312
      %v326 = vadd.f32 %v303, %v312
      %v327 = vadd.f32 %v304, %v312
      %v328 = vadd.f32 %v305, %v312
      %v329 = vadd.f32 %v306, %v312
      %330 = vst [vmem:[#allocation7] sm:$0xff] %v314
      %331 = vst [vmem:[#allocation7 + $0x8] sm:$0xff] %v315
      %332 = vst [vmem:[#allocation7 + $0x10] sm:$0xff] %v316
      %333 = vst [vmem:[#allocation7 + $0x18] sm:$0xff] %v317
      %334 = vst [vmem:[#allocation7 + $0x20] sm:$0xff] %v318
      %335 = vst [vmem:[#allocation7 + $0x28] sm:$0xff] %v319
      %336 = vst [vmem:[#allocation7 + $0x30] sm:$0xff] %v320
      %337 = vst [vmem:[#allocation7 + $0x38] sm:$0xff] %v321
      %338 = vst [vmem:[#allocation7 + $0x40] sm:$0xff] %v322
      %339 = vst [vmem:[#allocation7 + $0x48] sm:$0xff] %v323
      %340 = vst [vmem:[#allocation7 + $0x50] sm:$0xff] %v324
      %341 = vst [vmem:[#allocation7 + $0x58] sm:$0xff] %v325
      %342 = vst [vmem:[#allocation7 + $0x60] sm:$0xff] %v326
      %343 = vst [vmem:[#allocation7 + $0x68] sm:$0xff] %v327
      %344 = vst [vmem:[#allocation7 + $0x70] sm:$0xff] %v328
      %345 = vst [vmem:[#allocation7 + $0x78] sm:$0xff] %v329
    $region29: #{tpu_custom_call.1} parent=1 // pred_fallthru
      _
    // Predicated region
    $region30: #{tpu_custom_call.1} parent=1 // pred_check
      _
    $region31: #{tpu_custom_call.1} parent=1 // pred_check_branch
      %347 = sbr.rel (0) target = $region33
    $region32: #{tpu_custom_call.1} parent=1 // pred_region
      %s349 = ssub.s32 2048, 2048
      %350 = vsyncadd [#allocation4], %s349
      %s351 = sshll.u32 [#allocation7], 4
      %s352 = int_to_ptr.vmem [resolvable:$true] %s351
      %357 = dma.vmem_to_hbm [thread:$0]  %s352, 2048, %s3, [#allocation4], 128, 128, 8
    $region33: #{tpu_custom_call.1} parent=1 // pred_fallthru
      _
    // Predicated region
    $region34: #{tpu_custom_call.1} parent=1 // pred_check
      _
    $region35: #{tpu_custom_call.1} parent=1 // pred_check_branch
      %359 = sbr.rel (0) target = $region37
    $region36: #{tpu_custom_call.1} parent=1 // pred_region
      %360 = dma.done [#allocation4], 2048
    $region37: #{tpu_custom_call.1} parent=1 // pred_fallthru
      _
    %361 = vsyncpa [#allocation3], 1
    %362 = vsyncpa [#allocation6], 1
    %363 = vsyncpa [#allocation4], 1

</llo_original>
